<compile_context>
chip_gen: v5e
topology: v5e:2x2
jax: 0.10.0
libtpu: 0.0.40
codegen_flags: <defaults>
</compile_context>

<pallas_src>
import functools

import jax
import jax.numpy as jnp
from jax import lax
from jax.experimental import pallas as pl
from jax.experimental.pallas import tpu as pltpu

EOS_ID = 49


# ----------------------------- fused kernel ---------------------------------

def domslc_kernel(tok_ref, table_ref, lstm_ref, head_ref, out_ref,
                  *, T, B, E, H):
    B2 = 2 * B                       # left & right stacked along batch
    V = table_ref.shape[0]

    tok = tok_ref[...]                                           # (T*B2, 1) int32

    # In-kernel embedding gather as a one-hot matmul (toy vocab only).
    iota_v = lax.broadcasted_iota(jnp.int32, (T * B2, V), 1)
    onehot = (tok == iota_v).astype(jnp.float32)                 # (T*B2, V)
    emb_all = jnp.dot(onehot, table_ref[...],
                      preferred_element_type=jnp.float32)        # (T*B2, E)

    # Packed LSTM params: rows [0:E) = W_ih, [E:E+H) = W_hh, [E+H] = bias.
    # g-gate columns were pre-scaled by 2 at pack time (single-sigmoid trick).
    lstm_w = lstm_ref[...]                                       # (E+H+1, 4H)
    wih = lstm_w[0:E, :]
    whh = lstm_w[E:E + H, :]
    b = lstm_w[E + H:E + H + 1, :]

    # Input contribution to the gates for all steps, hoisted out of the loop.
    gx_all = jnp.dot(emb_all, wih,
                     preferred_element_type=jnp.float32) + b     # (T*B2, 4H)

    h = jnp.zeros((B2, H), jnp.float32)
    c = jnp.zeros((B2, H), jnp.float32)
    dec = jnp.zeros((B2, H), jnp.float32)

    # Statically unrolled recurrence (T is small); only h @ W_hh per step.
    for t in range(T):
        gates = gx_all[t * B2:(t + 1) * B2, :] + jnp.dot(
            h, whh, preferred_element_type=jnp.float32)          # (B2, 4H)
        sig = jax.nn.sigmoid(gates)                              # one EUP push, full vreg
        i = sig[:, 0:H]
        f = sig[:, H:2 * H]
        g = 2.0 * sig[:, 2 * H:3 * H] - 1.0                      # tanh(g) via pre-scaled cols
        o = sig[:, 3 * H:4 * H]
        c = f * c + i * g
        h = o * jnp.tanh(c)
        # Last-step selector straight from the token stream: overwrite so the
        # LAST row containing EOS wins ("last row containing EOS" semantics).
        is_eos = tok[t * B2:(t + 1) * B2, :] == EOS_ID           # (B2, 1)
        dec = jnp.where(is_eos, h, dec)

    # Pair head epilogue: left half * right half, then Linear(H, 2).
    head_w = head_ref[...]                                       # (H+1, 2)
    w_out = head_w[0:H, :]
    b_out = head_w[H:H + 1, :]
    prod = dec[:B, :] * dec[B:, :]                               # (B, H)
    out_ref[...] = (jnp.dot(prod, w_out,
                            preferred_element_type=jnp.float32) + b_out)


# ------------------------------ glue (plain JAX) ----------------------------

def pack_params(params):
    """One-time packing OUTSIDE jit: fewer inputs -> fewer per-call DMAs."""
    E = params["w_ih"].shape[0]
    H = params["w_hh"].shape[0]
    lstm = jnp.concatenate(
        [params["w_ih"], params["w_hh"], params["b"]], axis=0)   # (E+H+1, 4H)
    # Pre-scale g-gate columns by 2 so tanh(g) == 2*sigmoid(2g) - 1 in-kernel.
    col = jnp.arange(4 * H)
    gscale = jnp.where((col >= 2 * H) & (col < 3 * H), 2.0, 1.0)
    lstm = lstm * gscale[None, :].astype(jnp.float32)
    head = jnp.concatenate(
        [params["w_out"], params["b_out"]], axis=0)              # (H+1, 2)
    return {"table": params["embedding"], "lstm": lstm, "head": head}


def domslc_forward(pair_left, pair_right, packed):
    T, B = pair_left.shape
    E = packed["table"].shape[1]
    H = packed["head"].shape[0] - 1

    tokens2 = jnp.concatenate([pair_left, pair_right], axis=1)   # (T, 2B)
    tok_flat = tokens2.reshape(T * 2 * B, 1).astype(jnp.int32)   # (T*2B, 1)

    vmem = pl.BlockSpec(memory_space=pltpu.MemorySpace.VMEM)
    return pl.pallas_call(
        functools.partial(domslc_kernel, T=T, B=B, E=E, H=H),
        out_shape=jax.ShapeDtypeStruct((B, 2), jnp.float32),
        in_specs=[vmem, vmem, vmem, vmem],
        out_specs=vmem,
    )(tok_flat, packed["table"], packed["lstm"], packed["head"])


# ------------------------------ reference -----------------------------------

def compute_lengths(tokens):
    # tokens: (T, B). length[j] = last row i with tokens[i, j] == EOS_ID, plus 1.
    T = tokens.shape[0]
    pos = jnp.arange(1, T + 1, dtype=jnp.int32)[:, None]
    return jnp.max(jnp.where(tokens == EOS_ID, pos, 0), axis=0)


def lstm_reference(emb, lengths, w_ih, w_hh, b):
    T, B, E = emb.shape
    H = w_hh.shape[0]

    def step(carry, x):
        h, c = carry
        gates = x @ w_ih + h @ w_hh + b
        i = jax.nn.sigmoid(gates[:, :H])
        f = jax.nn.sigmoid(gates[:, H:2 * H])
        g = jnp.tanh(gates[:, 2 * H:3 * H])
        o = jax.nn.sigmoid(gates[:, 3 * H:])
        c = f * c + i * g
        h = o * jnp.tanh(c)
        return (h, c), h

    init = (jnp.zeros((B, H), jnp.float32), jnp.zeros((B, H), jnp.float32))
    _, hs = jax.lax.scan(step, init, emb)                 # (T, B, H)
    return hs[lengths - 1, jnp.arange(B)]                 # (B, H)


def domslc_ref(pair_left, pair_right, params):
    def side(tokens):
        emb = params["embedding"][tokens]
        return lstm_reference(emb, compute_lengths(tokens),
                              params["w_ih"], params["w_hh"], params["b"])
    prod = side(pair_left) * side(pair_right)
    return prod @ params["w_out"] + params["b_out"]


# --------------------------------- main --------------------------------------

if __name__ == "__main__":
    T, B, E, H, V = 8, 4, 32, 32, 50   # seq=8, batch=4, n_e=32, n_d=32, toy vocab

    key = jax.random.PRNGKey(0)
    ks = jax.random.split(key, 10)
    params = {
        "embedding": jax.random.normal(ks[0], (V, E), jnp.float32) * 0.1,
        "w_ih": jax.random.normal(ks[1], (E, 4 * H), jnp.float32) * 0.1,
        "w_hh": jax.random.normal(ks[2], (H, 4 * H), jnp.float32) * 0.1,
        "b": jax.random.normal(ks[3], (1, 4 * H), jnp.float32) * 0.1,   # b_ih + b_hh
        "w_out": jax.random.normal(ks[4], (H, 2), jnp.float32) * 0.1,
        "b_out": jax.random.normal(ks[5], (1, 2), jnp.float32) * 0.1,
    }
    packed = pack_params(params)       # one-time, outside jit

    def make_side(k_tok, k_len):
        toks = jax.random.randint(k_tok, (T, B), 0, EOS_ID, dtype=jnp.int32)
        lens = jax.random.randint(k_len, (B,), 3, T + 1, dtype=jnp.int32)
        row = jnp.arange(T, dtype=jnp.int32)[:, None]
        # place the EOS/length marker at row (len - 1) of each column
        return jnp.where(row == (lens - 1)[None, :], EOS_ID, toks)

    pair_left = make_side(ks[6], ks[7])
    pair_right = make_side(ks[8], ks[9])

    fwd = jax.jit(domslc_forward)
    out = jax.block_until_ready(fwd(pair_left, pair_right, packed))

    ref = domslc_ref(pair_left, pair_right, params)
    assert out.shape == (B, 2), out.shape
    assert jnp.allclose(out, ref, rtol=2e-3, atol=2e-3), (out, ref)

    print("KERNEL_OK")
</pallas_src>

<mosaic_0001>
module attributes {stable_mosaic.version = 11 : i64} {
  func.func @domslc_kernel(%arg0: memref<64x1xi32, #tpu.memory_space<vmem>>, %arg1: memref<50x32xf32, #tpu.memory_space<vmem>>, %arg2: memref<65x128xf32, #tpu.memory_space<vmem>>, %arg3: memref<33x2xf32, #tpu.memory_space<vmem>>, %arg4: memref<4x2xf32, #tpu.memory_space<vmem>>) attributes {dimension_semantics = [], scalar_prefetch = 0 : i64, scratch_operands = 0 : i64, tpu.core_type = #tpu.core_type<tc>} {
    %c0 = arith.constant 0 : index
    %c0_0 = arith.constant 0 : index
    %0 = vector.load %arg0[%c0, %c0_0] : memref<64x1xi32, #tpu.memory_space<vmem>>, vector<64x1xi32>
    %1 = tpu.iota {dimensions = array<i32: 1>} : vector<64x50xi32>
    %2 = vector.broadcast %0 : vector<64x1xi32> to vector<64x50xi32>
    %3 = arith.cmpi eq, %2, %1 : vector<64x50xi32>
    %4 = arith.extui %3 : vector<64x50xi1> to vector<64x50xi32>
    %5 = arith.sitofp %4 : vector<64x50xi32> to vector<64x50xf32>
    %c0_1 = arith.constant 0 : index
    %c0_2 = arith.constant 0 : index
    %6 = vector.load %arg1[%c0_1, %c0_2] : memref<50x32xf32, #tpu.memory_space<vmem>>, vector<50x32xf32>
    %cst = arith.constant dense<0.000000e+00> : vector<64x32xf32>
    %7 = tpu.matmul %5, %6, %cst {dimension_numbers = #tpu.dot_dimension_numbers<[1], [0], [0], [1], [0, 0, 1, 1], [], []>} : vector<64x50xf32>, vector<50x32xf32>, vector<64x32xf32> -> vector<64x32xf32>
    %c0_3 = arith.constant 0 : index
    %c0_4 = arith.constant 0 : index
    %8 = vector.load %arg2[%c0_3, %c0_4] : memref<65x128xf32, #tpu.memory_space<vmem>>, vector<65x128xf32>
    %9 = vector.extract_strided_slice %8 {offsets = [0, 0], sizes = [32, 128], strides = [1, 1]} : vector<65x128xf32> to vector<32x128xf32>
    %10 = vector.extract_strided_slice %8 {offsets = [32, 0], sizes = [32, 128], strides = [1, 1]} : vector<65x128xf32> to vector<32x128xf32>
    %11 = vector.extract_strided_slice %8 {offsets = [64, 0], sizes = [1, 128], strides = [1, 1]} : vector<65x128xf32> to vector<1x128xf32>
    %cst_5 = arith.constant dense<0.000000e+00> : vector<64x128xf32>
    %12 = tpu.matmul %7, %9, %cst_5 {dimension_numbers = #tpu.dot_dimension_numbers<[1], [0], [0], [1], [0, 0, 1, 1], [], []>} : vector<64x32xf32>, vector<32x128xf32>, vector<64x128xf32> -> vector<64x128xf32>
    %13 = vector.broadcast %11 : vector<1x128xf32> to vector<64x128xf32>
    %14 = arith.addf %12, %13 : vector<64x128xf32>
    %cst_6 = arith.constant 0.000000e+00 : f32
    %15 = vector.broadcast %cst_6 : f32 to vector<8x32xf32>
    %cst_7 = arith.constant 0.000000e+00 : f32
    %16 = vector.broadcast %cst_7 : f32 to vector<8x32xf32>
    %cst_8 = arith.constant 0.000000e+00 : f32
    %17 = vector.broadcast %cst_8 : f32 to vector<8x32xf32>
    %18 = vector.extract_strided_slice %14 {offsets = [0, 0], sizes = [8, 128], strides = [1, 1]} : vector<64x128xf32> to vector<8x128xf32>
    %cst_9 = arith.constant dense<0.000000e+00> : vector<8x128xf32>
    %19 = tpu.matmul %15, %10, %cst_9 {dimension_numbers = #tpu.dot_dimension_numbers<[1], [0], [0], [1], [0, 0, 1, 1], [], []>} : vector<8x32xf32>, vector<32x128xf32>, vector<8x128xf32> -> vector<8x128xf32>
    %20 = arith.addf %18, %19 : vector<8x128xf32>
    %21 = arith.negf %20 : vector<8x128xf32>
    %22 = math.exp %21 : vector<8x128xf32>
    %cst_10 = arith.constant 1.000000e+00 : f32
    %23 = vector.broadcast %cst_10 : f32 to vector<8x128xf32>
    %24 = arith.addf %23, %22 : vector<8x128xf32>
    %25 = arith.divf %23, %24 : vector<8x128xf32>
    %26 = vector.extract_strided_slice %25 {offsets = [0, 0], sizes = [8, 32], strides = [1, 1]} : vector<8x128xf32> to vector<8x32xf32>
    %27 = vector.extract_strided_slice %25 {offsets = [0, 32], sizes = [8, 32], strides = [1, 1]} : vector<8x128xf32> to vector<8x32xf32>
    %28 = vector.extract_strided_slice %25 {offsets = [0, 64], sizes = [8, 32], strides = [1, 1]} : vector<8x128xf32> to vector<8x32xf32>
    %cst_11 = arith.constant 2.000000e+00 : f32
    %29 = vector.broadcast %cst_11 : f32 to vector<8x32xf32>
    %30 = arith.mulf %29, %28 : vector<8x32xf32>
    %cst_12 = arith.constant 1.000000e+00 : f32
    %31 = vector.broadcast %cst_12 : f32 to vector<8x32xf32>
    %32 = arith.subf %30, %31 : vector<8x32xf32>
    %33 = vector.extract_strided_slice %25 {offsets = [0, 96], sizes = [8, 32], strides = [1, 1]} : vector<8x128xf32> to vector<8x32xf32>
    %34 = arith.mulf %27, %16 : vector<8x32xf32>
    %35 = arith.mulf %26, %32 : vector<8x32xf32>
    %36 = arith.addf %34, %35 : vector<8x32xf32>
    %37 = math.tanh %36 : vector<8x32xf32>
    %38 = arith.mulf %33, %37 : vector<8x32xf32>
    %39 = vector.extract_strided_slice %0 {offsets = [0, 0], sizes = [8, 1], strides = [1, 1]} : vector<64x1xi32> to vector<8x1xi32>
    %c49_i32 = arith.constant 49 : i32
    %40 = vector.broadcast %c49_i32 : i32 to vector<8x1xi32>
    %41 = arith.cmpi eq, %39, %40 : vector<8x1xi32>
    %42 = vector.shape_cast %41 : vector<8x1xi1> to vector<8x1xi1>
    %43 = vector.broadcast %42 : vector<8x1xi1> to vector<8x32xi1>
    %44 = arith.select %43, %38, %17 : vector<8x32xi1>, vector<8x32xf32>
    %45 = vector.extract_strided_slice %14 {offsets = [8, 0], sizes = [8, 128], strides = [1, 1]} : vector<64x128xf32> to vector<8x128xf32>
    %cst_13 = arith.constant dense<0.000000e+00> : vector<8x128xf32>
    %46 = tpu.matmul %38, %10, %cst_13 {dimension_numbers = #tpu.dot_dimension_numbers<[1], [0], [0], [1], [0, 0, 1, 1], [], []>} : vector<8x32xf32>, vector<32x128xf32>, vector<8x128xf32> -> vector<8x128xf32>
    %47 = arith.addf %45, %46 : vector<8x128xf32>
    %48 = arith.negf %47 : vector<8x128xf32>
    %49 = math.exp %48 : vector<8x128xf32>
    %cst_14 = arith.constant 1.000000e+00 : f32
    %50 = vector.broadcast %cst_14 : f32 to vector<8x128xf32>
    %51 = arith.addf %50, %49 : vector<8x128xf32>
    %52 = arith.divf %50, %51 : vector<8x128xf32>
    %53 = vector.extract_strided_slice %52 {offsets = [0, 0], sizes = [8, 32], strides = [1, 1]} : vector<8x128xf32> to vector<8x32xf32>
    %54 = vector.extract_strided_slice %52 {offsets = [0, 32], sizes = [8, 32], strides = [1, 1]} : vector<8x128xf32> to vector<8x32xf32>
    %55 = vector.extract_strided_slice %52 {offsets = [0, 64], sizes = [8, 32], strides = [1, 1]} : vector<8x128xf32> to vector<8x32xf32>
    %cst_15 = arith.constant 2.000000e+00 : f32
    %56 = vector.broadcast %cst_15 : f32 to vector<8x32xf32>
    %57 = arith.mulf %56, %55 : vector<8x32xf32>
    %cst_16 = arith.constant 1.000000e+00 : f32
    %58 = vector.broadcast %cst_16 : f32 to vector<8x32xf32>
    %59 = arith.subf %57, %58 : vector<8x32xf32>
    %60 = vector.extract_strided_slice %52 {offsets = [0, 96], sizes = [8, 32], strides = [1, 1]} : vector<8x128xf32> to vector<8x32xf32>
    %61 = arith.mulf %54, %36 : vector<8x32xf32>
    %62 = arith.mulf %53, %59 : vector<8x32xf32>
    %63 = arith.addf %61, %62 : vector<8x32xf32>
    %64 = math.tanh %63 : vector<8x32xf32>
    %65 = arith.mulf %60, %64 : vector<8x32xf32>
    %66 = vector.extract_strided_slice %0 {offsets = [8, 0], sizes = [8, 1], strides = [1, 1]} : vector<64x1xi32> to vector<8x1xi32>
    %c49_i32_17 = arith.constant 49 : i32
    %67 = vector.broadcast %c49_i32_17 : i32 to vector<8x1xi32>
    %68 = arith.cmpi eq, %66, %67 : vector<8x1xi32>
    %69 = vector.shape_cast %68 : vector<8x1xi1> to vector<8x1xi1>
    %70 = vector.broadcast %69 : vector<8x1xi1> to vector<8x32xi1>
    %71 = arith.select %70, %65, %44 : vector<8x32xi1>, vector<8x32xf32>
    %72 = vector.extract_strided_slice %14 {offsets = [16, 0], sizes = [8, 128], strides = [1, 1]} : vector<64x128xf32> to vector<8x128xf32>
    %cst_18 = arith.constant dense<0.000000e+00> : vector<8x128xf32>
    %73 = tpu.matmul %65, %10, %cst_18 {dimension_numbers = #tpu.dot_dimension_numbers<[1], [0], [0], [1], [0, 0, 1, 1], [], []>} : vector<8x32xf32>, vector<32x128xf32>, vector<8x128xf32> -> vector<8x128xf32>
    %74 = arith.addf %72, %73 : vector<8x128xf32>
    %75 = arith.negf %74 : vector<8x128xf32>
    %76 = math.exp %75 : vector<8x128xf32>
    %cst_19 = arith.constant 1.000000e+00 : f32
    %77 = vector.broadcast %cst_19 : f32 to vector<8x128xf32>
    %78 = arith.addf %77, %76 : vector<8x128xf32>
    %79 = arith.divf %77, %78 : vector<8x128xf32>
    %80 = vector.extract_strided_slice %79 {offsets = [0, 0], sizes = [8, 32], strides = [1, 1]} : vector<8x128xf32> to vector<8x32xf32>
    %81 = vector.extract_strided_slice %79 {offsets = [0, 32], sizes = [8, 32], strides = [1, 1]} : vector<8x128xf32> to vector<8x32xf32>
    %82 = vector.extract_strided_slice %79 {offsets = [0, 64], sizes = [8, 32], strides = [1, 1]} : vector<8x128xf32> to vector<8x32xf32>
    %cst_20 = arith.constant 2.000000e+00 : f32
    %83 = vector.broadcast %cst_20 : f32 to vector<8x32xf32>
    %84 = arith.mulf %83, %82 : vector<8x32xf32>
    %cst_21 = arith.constant 1.000000e+00 : f32
    %85 = vector.broadcast %cst_21 : f32 to vector<8x32xf32>
    %86 = arith.subf %84, %85 : vector<8x32xf32>
    %87 = vector.extract_strided_slice %79 {offsets = [0, 96], sizes = [8, 32], strides = [1, 1]} : vector<8x128xf32> to vector<8x32xf32>
    %88 = arith.mulf %81, %63 : vector<8x32xf32>
    %89 = arith.mulf %80, %86 : vector<8x32xf32>
    %90 = arith.addf %88, %89 : vector<8x32xf32>
    %91 = math.tanh %90 : vector<8x32xf32>
    %92 = arith.mulf %87, %91 : vector<8x32xf32>
    %93 = vector.extract_strided_slice %0 {offsets = [16, 0], sizes = [8, 1], strides = [1, 1]} : vector<64x1xi32> to vector<8x1xi32>
    %c49_i32_22 = arith.constant 49 : i32
    %94 = vector.broadcast %c49_i32_22 : i32 to vector<8x1xi32>
    %95 = arith.cmpi eq, %93, %94 : vector<8x1xi32>
    %96 = vector.shape_cast %95 : vector<8x1xi1> to vector<8x1xi1>
    %97 = vector.broadcast %96 : vector<8x1xi1> to vector<8x32xi1>
    %98 = arith.select %97, %92, %71 : vector<8x32xi1>, vector<8x32xf32>
    %99 = vector.extract_strided_slice %14 {offsets = [24, 0], sizes = [8, 128], strides = [1, 1]} : vector<64x128xf32> to vector<8x128xf32>
    %cst_23 = arith.constant dense<0.000000e+00> : vector<8x128xf32>
    %100 = tpu.matmul %92, %10, %cst_23 {dimension_numbers = #tpu.dot_dimension_numbers<[1], [0], [0], [1], [0, 0, 1, 1], [], []>} : vector<8x32xf32>, vector<32x128xf32>, vector<8x128xf32> -> vector<8x128xf32>
    %101 = arith.addf %99, %100 : vector<8x128xf32>
    %102 = arith.negf %101 : vector<8x128xf32>
    %103 = math.exp %102 : vector<8x128xf32>
    %cst_24 = arith.constant 1.000000e+00 : f32
    %104 = vector.broadcast %cst_24 : f32 to vector<8x128xf32>
    %105 = arith.addf %104, %103 : vector<8x128xf32>
    %106 = arith.divf %104, %105 : vector<8x128xf32>
    %107 = vector.extract_strided_slice %106 {offsets = [0, 0], sizes = [8, 32], strides = [1, 1]} : vector<8x128xf32> to vector<8x32xf32>
    %108 = vector.extract_strided_slice %106 {offsets = [0, 32], sizes = [8, 32], strides = [1, 1]} : vector<8x128xf32> to vector<8x32xf32>
    %109 = vector.extract_strided_slice %106 {offsets = [0, 64], sizes = [8, 32], strides = [1, 1]} : vector<8x128xf32> to vector<8x32xf32>
    %cst_25 = arith.constant 2.000000e+00 : f32
    %110 = vector.broadcast %cst_25 : f32 to vector<8x32xf32>
    %111 = arith.mulf %110, %109 : vector<8x32xf32>
    %cst_26 = arith.constant 1.000000e+00 : f32
    %112 = vector.broadcast %cst_26 : f32 to vector<8x32xf32>
    %113 = arith.subf %111, %112 : vector<8x32xf32>
    %114 = vector.extract_strided_slice %106 {offsets = [0, 96], sizes = [8, 32], strides = [1, 1]} : vector<8x128xf32> to vector<8x32xf32>
    %115 = arith.mulf %108, %90 : vector<8x32xf32>
    %116 = arith.mulf %107, %113 : vector<8x32xf32>
    %117 = arith.addf %115, %116 : vector<8x32xf32>
    %118 = math.tanh %117 : vector<8x32xf32>
    %119 = arith.mulf %114, %118 : vector<8x32xf32>
    %120 = vector.extract_strided_slice %0 {offsets = [24, 0], sizes = [8, 1], strides = [1, 1]} : vector<64x1xi32> to vector<8x1xi32>
    %c49_i32_27 = arith.constant 49 : i32
    %121 = vector.broadcast %c49_i32_27 : i32 to vector<8x1xi32>
    %122 = arith.cmpi eq, %120, %121 : vector<8x1xi32>
    %123 = vector.shape_cast %122 : vector<8x1xi1> to vector<8x1xi1>
    %124 = vector.broadcast %123 : vector<8x1xi1> to vector<8x32xi1>
    %125 = arith.select %124, %119, %98 : vector<8x32xi1>, vector<8x32xf32>
    %126 = vector.extract_strided_slice %14 {offsets = [32, 0], sizes = [8, 128], strides = [1, 1]} : vector<64x128xf32> to vector<8x128xf32>
    %cst_28 = arith.constant dense<0.000000e+00> : vector<8x128xf32>
    %127 = tpu.matmul %119, %10, %cst_28 {dimension_numbers = #tpu.dot_dimension_numbers<[1], [0], [0], [1], [0, 0, 1, 1], [], []>} : vector<8x32xf32>, vector<32x128xf32>, vector<8x128xf32> -> vector<8x128xf32>
    %128 = arith.addf %126, %127 : vector<8x128xf32>
    %129 = arith.negf %128 : vector<8x128xf32>
    %130 = math.exp %129 : vector<8x128xf32>
    %cst_29 = arith.constant 1.000000e+00 : f32
    %131 = vector.broadcast %cst_29 : f32 to vector<8x128xf32>
    %132 = arith.addf %131, %130 : vector<8x128xf32>
    %133 = arith.divf %131, %132 : vector<8x128xf32>
    %134 = vector.extract_strided_slice %133 {offsets = [0, 0], sizes = [8, 32], strides = [1, 1]} : vector<8x128xf32> to vector<8x32xf32>
    %135 = vector.extract_strided_slice %133 {offsets = [0, 32], sizes = [8, 32], strides = [1, 1]} : vector<8x128xf32> to vector<8x32xf32>
    %136 = vector.extract_strided_slice %133 {offsets = [0, 64], sizes = [8, 32], strides = [1, 1]} : vector<8x128xf32> to vector<8x32xf32>
    %cst_30 = arith.constant 2.000000e+00 : f32
    %137 = vector.broadcast %cst_30 : f32 to vector<8x32xf32>
    %138 = arith.mulf %137, %136 : vector<8x32xf32>
    %cst_31 = arith.constant 1.000000e+00 : f32
    %139 = vector.broadcast %cst_31 : f32 to vector<8x32xf32>
    %140 = arith.subf %138, %139 : vector<8x32xf32>
    %141 = vector.extract_strided_slice %133 {offsets = [0, 96], sizes = [8, 32], strides = [1, 1]} : vector<8x128xf32> to vector<8x32xf32>
    %142 = arith.mulf %135, %117 : vector<8x32xf32>
    %143 = arith.mulf %134, %140 : vector<8x32xf32>
    %144 = arith.addf %142, %143 : vector<8x32xf32>
    %145 = math.tanh %144 : vector<8x32xf32>
    %146 = arith.mulf %141, %145 : vector<8x32xf32>
    %147 = vector.extract_strided_slice %0 {offsets = [32, 0], sizes = [8, 1], strides = [1, 1]} : vector<64x1xi32> to vector<8x1xi32>
    %c49_i32_32 = arith.constant 49 : i32
    %148 = vector.broadcast %c49_i32_32 : i32 to vector<8x1xi32>
    %149 = arith.cmpi eq, %147, %148 : vector<8x1xi32>
    %150 = vector.shape_cast %149 : vector<8x1xi1> to vector<8x1xi1>
    %151 = vector.broadcast %150 : vector<8x1xi1> to vector<8x32xi1>
    %152 = arith.select %151, %146, %125 : vector<8x32xi1>, vector<8x32xf32>
    %153 = vector.extract_strided_slice %14 {offsets = [40, 0], sizes = [8, 128], strides = [1, 1]} : vector<64x128xf32> to vector<8x128xf32>
    %cst_33 = arith.constant dense<0.000000e+00> : vector<8x128xf32>
    %154 = tpu.matmul %146, %10, %cst_33 {dimension_numbers = #tpu.dot_dimension_numbers<[1], [0], [0], [1], [0, 0, 1, 1], [], []>} : vector<8x32xf32>, vector<32x128xf32>, vector<8x128xf32> -> vector<8x128xf32>
    %155 = arith.addf %153, %154 : vector<8x128xf32>
    %156 = arith.negf %155 : vector<8x128xf32>
    %157 = math.exp %156 : vector<8x128xf32>
    %cst_34 = arith.constant 1.000000e+00 : f32
    %158 = vector.broadcast %cst_34 : f32 to vector<8x128xf32>
    %159 = arith.addf %158, %157 : vector<8x128xf32>
    %160 = arith.divf %158, %159 : vector<8x128xf32>
    %161 = vector.extract_strided_slice %160 {offsets = [0, 0], sizes = [8, 32], strides = [1, 1]} : vector<8x128xf32> to vector<8x32xf32>
    %162 = vector.extract_strided_slice %160 {offsets = [0, 32], sizes = [8, 32], strides = [1, 1]} : vector<8x128xf32> to vector<8x32xf32>
    %163 = vector.extract_strided_slice %160 {offsets = [0, 64], sizes = [8, 32], strides = [1, 1]} : vector<8x128xf32> to vector<8x32xf32>
    %cst_35 = arith.constant 2.000000e+00 : f32
    %164 = vector.broadcast %cst_35 : f32 to vector<8x32xf32>
    %165 = arith.mulf %164, %163 : vector<8x32xf32>
    %cst_36 = arith.constant 1.000000e+00 : f32
    %166 = vector.broadcast %cst_36 : f32 to vector<8x32xf32>
    %167 = arith.subf %165, %166 : vector<8x32xf32>
    %168 = vector.extract_strided_slice %160 {offsets = [0, 96], sizes = [8, 32], strides = [1, 1]} : vector<8x128xf32> to vector<8x32xf32>
    %169 = arith.mulf %162, %144 : vector<8x32xf32>
    %170 = arith.mulf %161, %167 : vector<8x32xf32>
    %171 = arith.addf %169, %170 : vector<8x32xf32>
    %172 = math.tanh %171 : vector<8x32xf32>
    %173 = arith.mulf %168, %172 : vector<8x32xf32>
    %174 = vector.extract_strided_slice %0 {offsets = [40, 0], sizes = [8, 1], strides = [1, 1]} : vector<64x1xi32> to vector<8x1xi32>
    %c49_i32_37 = arith.constant 49 : i32
    %175 = vector.broadcast %c49_i32_37 : i32 to vector<8x1xi32>
    %176 = arith.cmpi eq, %174, %175 : vector<8x1xi32>
    %177 = vector.shape_cast %176 : vector<8x1xi1> to vector<8x1xi1>
    %178 = vector.broadcast %177 : vector<8x1xi1> to vector<8x32xi1>
    %179 = arith.select %178, %173, %152 : vector<8x32xi1>, vector<8x32xf32>
    %180 = vector.extract_strided_slice %14 {offsets = [48, 0], sizes = [8, 128], strides = [1, 1]} : vector<64x128xf32> to vector<8x128xf32>
    %cst_38 = arith.constant dense<0.000000e+00> : vector<8x128xf32>
    %181 = tpu.matmul %173, %10, %cst_38 {dimension_numbers = #tpu.dot_dimension_numbers<[1], [0], [0], [1], [0, 0, 1, 1], [], []>} : vector<8x32xf32>, vector<32x128xf32>, vector<8x128xf32> -> vector<8x128xf32>
    %182 = arith.addf %180, %181 : vector<8x128xf32>
    %183 = arith.negf %182 : vector<8x128xf32>
    %184 = math.exp %183 : vector<8x128xf32>
    %cst_39 = arith.constant 1.000000e+00 : f32
    %185 = vector.broadcast %cst_39 : f32 to vector<8x128xf32>
    %186 = arith.addf %185, %184 : vector<8x128xf32>
    %187 = arith.divf %185, %186 : vector<8x128xf32>
    %188 = vector.extract_strided_slice %187 {offsets = [0, 0], sizes = [8, 32], strides = [1, 1]} : vector<8x128xf32> to vector<8x32xf32>
    %189 = vector.extract_strided_slice %187 {offsets = [0, 32], sizes = [8, 32], strides = [1, 1]} : vector<8x128xf32> to vector<8x32xf32>
    %190 = vector.extract_strided_slice %187 {offsets = [0, 64], sizes = [8, 32], strides = [1, 1]} : vector<8x128xf32> to vector<8x32xf32>
    %cst_40 = arith.constant 2.000000e+00 : f32
    %191 = vector.broadcast %cst_40 : f32 to vector<8x32xf32>
    %192 = arith.mulf %191, %190 : vector<8x32xf32>
    %cst_41 = arith.constant 1.000000e+00 : f32
    %193 = vector.broadcast %cst_41 : f32 to vector<8x32xf32>
    %194 = arith.subf %192, %193 : vector<8x32xf32>
    %195 = vector.extract_strided_slice %187 {offsets = [0, 96], sizes = [8, 32], strides = [1, 1]} : vector<8x128xf32> to vector<8x32xf32>
    %196 = arith.mulf %189, %171 : vector<8x32xf32>
    %197 = arith.mulf %188, %194 : vector<8x32xf32>
    %198 = arith.addf %196, %197 : vector<8x32xf32>
    %199 = math.tanh %198 : vector<8x32xf32>
    %200 = arith.mulf %195, %199 : vector<8x32xf32>
    %201 = vector.extract_strided_slice %0 {offsets = [48, 0], sizes = [8, 1], strides = [1, 1]} : vector<64x1xi32> to vector<8x1xi32>
    %c49_i32_42 = arith.constant 49 : i32
    %202 = vector.broadcast %c49_i32_42 : i32 to vector<8x1xi32>
    %203 = arith.cmpi eq, %201, %202 : vector<8x1xi32>
    %204 = vector.shape_cast %203 : vector<8x1xi1> to vector<8x1xi1>
    %205 = vector.broadcast %204 : vector<8x1xi1> to vector<8x32xi1>
    %206 = arith.select %205, %200, %179 : vector<8x32xi1>, vector<8x32xf32>
    %207 = vector.extract_strided_slice %14 {offsets = [56, 0], sizes = [8, 128], strides = [1, 1]} : vector<64x128xf32> to vector<8x128xf32>
    %cst_43 = arith.constant dense<0.000000e+00> : vector<8x128xf32>
    %208 = tpu.matmul %200, %10, %cst_43 {dimension_numbers = #tpu.dot_dimension_numbers<[1], [0], [0], [1], [0, 0, 1, 1], [], []>} : vector<8x32xf32>, vector<32x128xf32>, vector<8x128xf32> -> vector<8x128xf32>
    %209 = arith.addf %207, %208 : vector<8x128xf32>
    %210 = arith.negf %209 : vector<8x128xf32>
    %211 = math.exp %210 : vector<8x128xf32>
    %cst_44 = arith.constant 1.000000e+00 : f32
    %212 = vector.broadcast %cst_44 : f32 to vector<8x128xf32>
    %213 = arith.addf %212, %211 : vector<8x128xf32>
    %214 = arith.divf %212, %213 : vector<8x128xf32>
    %215 = vector.extract_strided_slice %214 {offsets = [0, 0], sizes = [8, 32], strides = [1, 1]} : vector<8x128xf32> to vector<8x32xf32>
    %216 = vector.extract_strided_slice %214 {offsets = [0, 32], sizes = [8, 32], strides = [1, 1]} : vector<8x128xf32> to vector<8x32xf32>
    %217 = vector.extract_strided_slice %214 {offsets = [0, 64], sizes = [8, 32], strides = [1, 1]} : vector<8x128xf32> to vector<8x32xf32>
    %cst_45 = arith.constant 2.000000e+00 : f32
    %218 = vector.broadcast %cst_45 : f32 to vector<8x32xf32>
    %219 = arith.mulf %218, %217 : vector<8x32xf32>
    %cst_46 = arith.constant 1.000000e+00 : f32
    %220 = vector.broadcast %cst_46 : f32 to vector<8x32xf32>
    %221 = arith.subf %219, %220 : vector<8x32xf32>
    %222 = vector.extract_strided_slice %214 {offsets = [0, 96], sizes = [8, 32], strides = [1, 1]} : vector<8x128xf32> to vector<8x32xf32>
    %223 = arith.mulf %216, %198 : vector<8x32xf32>
    %224 = arith.mulf %215, %221 : vector<8x32xf32>
    %225 = arith.addf %223, %224 : vector<8x32xf32>
    %226 = math.tanh %225 : vector<8x32xf32>
    %227 = arith.mulf %222, %226 : vector<8x32xf32>
    %228 = vector.extract_strided_slice %0 {offsets = [56, 0], sizes = [8, 1], strides = [1, 1]} : vector<64x1xi32> to vector<8x1xi32>
    %c49_i32_47 = arith.constant 49 : i32
    %229 = vector.broadcast %c49_i32_47 : i32 to vector<8x1xi32>
    %230 = arith.cmpi eq, %228, %229 : vector<8x1xi32>
    %231 = vector.shape_cast %230 : vector<8x1xi1> to vector<8x1xi1>
    %232 = vector.broadcast %231 : vector<8x1xi1> to vector<8x32xi1>
    %233 = arith.select %232, %227, %206 : vector<8x32xi1>, vector<8x32xf32>
    %c0_48 = arith.constant 0 : index
    %c0_49 = arith.constant 0 : index
    %234 = vector.load %arg3[%c0_48, %c0_49] : memref<33x2xf32, #tpu.memory_space<vmem>>, vector<33x2xf32>
    %235 = vector.extract_strided_slice %234 {offsets = [0, 0], sizes = [32, 2], strides = [1, 1]} : vector<33x2xf32> to vector<32x2xf32>
    %236 = vector.extract_strided_slice %234 {offsets = [32, 0], sizes = [1, 2], strides = [1, 1]} : vector<33x2xf32> to vector<1x2xf32>
    %237 = vector.extract_strided_slice %233 {offsets = [0, 0], sizes = [4, 32], strides = [1, 1]} : vector<8x32xf32> to vector<4x32xf32>
    %238 = vector.extract_strided_slice %233 {offsets = [4, 0], sizes = [4, 32], strides = [1, 1]} : vector<8x32xf32> to vector<4x32xf32>
    %239 = arith.mulf %237, %238 : vector<4x32xf32>
    %cst_50 = arith.constant dense<0.000000e+00> : vector<4x2xf32>
    %240 = tpu.matmul %239, %235, %cst_50 {dimension_numbers = #tpu.dot_dimension_numbers<[1], [0], [0], [1], [0, 0, 1, 1], [], []>} : vector<4x32xf32>, vector<32x2xf32>, vector<4x2xf32> -> vector<4x2xf32>
    %241 = vector.broadcast %236 : vector<1x2xf32> to vector<4x2xf32>
    %242 = arith.addf %240, %241 : vector<4x2xf32>
    %c0_51 = arith.constant 0 : index
    %c0_52 = arith.constant 0 : index
    %243 = vector.load %arg4[%c0_51, %c0_52] : memref<4x2xf32, #tpu.memory_space<vmem>>, vector<4x2xf32>
    tpu.vector_store %arg4[%c0_51, %c0_52], %242 {strides = array<i32>} : memref<4x2xf32, #tpu.memory_space<vmem>>, vector<4x2xf32>,
    return
  }
}

</mosaic_0001>

<llo_original>
// kernel: domslc_forward.1
$region0: #{domslc_forward.1}
  #allocation0 [shape = 'u32[]', space=smem, size = 0x4, offset = 0x4, fixed_abs, tag = 'smem constant byte address 0x4 - core index']
  #allocation1 [shape = 'u32[72,128]{1,0:T(1,128)}', space=vmem, size = 0x9000, scoped, tag = 'internal scratch']
  %s0 = inlined_call_operand.vmem [shape: s32[64,1], index: 0, kind: input, shape index: {}]
  %s1 = inlined_call_operand.vmem [shape: f32[50,32], index: 1, kind: input, shape index: {}]
  %s2 = inlined_call_operand.vmem [shape: f32[65,128], index: 2, kind: input, shape index: {}]
  %s3 = inlined_call_operand.vmem [shape: f32[33,2], index: 3, kind: input, shape index: {}]
  %s4 = inlined_call_operand.vmem [shape: f32[4,2], index: 4, kind: output, shape index: {}]
  %s5 = sld [smem:[#allocation0]]
  $region26: #{domslc_forward.1} parent=0
    _
  %s7 = ssub.s32 1, %s5
  %s8 = scalar_select 0, %s7, %s5
  // Predicated region
  $region2: #{domslc_forward.1} parent=0 // pred_check
    _
  $region3: #{domslc_forward.1} parent=0 // pred_check_branch
    %10 = sbr.rel (0) target = $region5
  $region4: #{domslc_forward.1} parent=0 // pred_region
    _
  $region5: #{domslc_forward.1} parent=0 // pred_fallthru
    _
  // Predicated region
  $region6: #{domslc_forward.1} parent=0 // pred_check
    _
  $region7: #{domslc_forward.1} parent=0 // pred_check_branch
    %12 = sbr.rel (0) target = $region9
  $region8: #{domslc_forward.1} parent=0 // pred_region
    _
  $region9: #{domslc_forward.1} parent=0 // pred_fallthru
    _
  // Predicated region
  $region10: #{domslc_forward.1} parent=0 // pred_check
    _
  $region11: #{domslc_forward.1} parent=0 // pred_check_branch
    %14 = sbr.rel (0) target = $region13
  $region12: #{domslc_forward.1} parent=0 // pred_region
    _
  $region13: #{domslc_forward.1} parent=0 // pred_fallthru
    _
  // Predicated region
  $region14: #{domslc_forward.1} parent=0 // pred_check
    _
  $region15: #{domslc_forward.1} parent=0 // pred_check_branch
    %16 = sbr.rel (0) target = $region17
  $region16: #{domslc_forward.1} parent=0 // pred_region
    _
  $region17: #{domslc_forward.1} parent=0 // pred_fallthru
    _
  %v17 = vld [vmem:[%s0] sm:$0xff]
  %v18 = vld [vmem:[%s0 + $0x8] sm:$0xff]
  %v19 = vld [vmem:[%s0 + $0x10] sm:$0xff]
  %v20 = vld [vmem:[%s0 + $0x18] sm:$0xff]
  %v21 = vld [vmem:[%s0 + $0x20] sm:$0xff]
  %v22 = vld [vmem:[%s0 + $0x28] sm:$0xff]
  %v23 = vld [vmem:[%s0 + $0x30] sm:$0xff]
  %v24 = vld [vmem:[%s0 + $0x38] sm:$0xff]
  %v25 = vlaneseq
  %v26 = vand.u32 %v25, 127
  %27 = vset.pattern.permute.xlu0 0
  %28 = vperm.xlu0 %27, %v17
  %v29 = vpop.permute.xlu0 %28
  %30 = vset.pattern.permute.xlu0 0
  %31 = vperm.xlu0 %30, %v18
  %v32 = vpop.permute.xlu0 %31
  %33 = vset.pattern.permute.xlu0 0
  %34 = vperm.xlu0 %33, %v19
  %v35 = vpop.permute.xlu0 %34
  %36 = vset.pattern.permute.xlu0 0
  %37 = vperm.xlu0 %36, %v20
  %v38 = vpop.permute.xlu0 %37
  %39 = vset.pattern.permute.xlu0 0
  %40 = vperm.xlu0 %39, %v21
  %v41 = vpop.permute.xlu0 %40
  %42 = vset.pattern.permute.xlu0 0
  %43 = vperm.xlu0 %42, %v22
  %v44 = vpop.permute.xlu0 %43
  %45 = vset.pattern.permute.xlu0 0
  %46 = vperm.xlu0 %45, %v23
  %v47 = vpop.permute.xlu0 %46
  %48 = vset.pattern.permute.xlu0 0
  %49 = vperm.xlu0 %48, %v24
  %v50 = vpop.permute.xlu0 %49
  %vm51 = vcmp.eq.s32.totalorder %v29, %v26
  %vm52 = vcmp.eq.s32.totalorder %v32, %v26
  %vm53 = vcmp.eq.s32.totalorder %v35, %v26
  %vm54 = vcmp.eq.s32.totalorder %v38, %v26
  %vm55 = vcmp.eq.s32.totalorder %v41, %v26
  %vm56 = vcmp.eq.s32.totalorder %v44, %v26
  %vm57 = vcmp.eq.s32.totalorder %v47, %v26
  %vm58 = vcmp.eq.s32.totalorder %v50, %v26
  %v59 = vsel %vm51, 1, 0
  %v60 = vsel %vm52, 1, 0
  %v61 = vsel %vm53, 1, 0
  %v62 = vsel %vm54, 1, 0
  %v63 = vsel %vm55, 1, 0
  %v64 = vsel %vm56, 1, 0
  %v65 = vsel %vm57, 1, 0
  %v66 = vsel %vm58, 1, 0
  %v67 = vcvt.s32.f32 %v59
  %v68 = vcvt.s32.f32 %v60
  %v69 = vcvt.s32.f32 %v61
  %v70 = vcvt.s32.f32 %v62
  %v71 = vcvt.s32.f32 %v63
  %v72 = vcvt.s32.f32 %v64
  %v73 = vcvt.s32.f32 %v65
  %v74 = vcvt.s32.f32 %v66
  %v75 = vld [vmem:[%s1] sm:$0xff]
  %v76 = vld [vmem:[%s1 + $0x8] sm:$0xff]
  %v77 = vld [vmem:[%s1 + $0x10] sm:$0xff]
  %v78 = vld [vmem:[%s1 + $0x18] sm:$0xff]
  %v79 = vld [vmem:[%s1 + $0x20] sm:$0xff]
  %v80 = vld [vmem:[%s1 + $0x28] sm:$0xff]
  %v81 = vld [vmem:[%s1 + $0x30] sm:$0x3]
  %vm82 = vcmask 408576
  %v84 = vsel %vm82, %v67, 0
  %v87 = vsel %vm82, %v68, 0
  %v90 = vsel %vm82, %v69, 0
  %v93 = vsel %vm82, %v70, 0
  %v96 = vsel %vm82, %v71, 0
  %v99 = vsel %vm82, %v72, 0
  %v102 = vsel %vm82, %v73, 0
  %v105 = vsel %vm82, %v74, 0
  %vm107 = vcmask 1041408
  %v109 = vsel %vm107, %v81, 0
  %111 = vmatpush.msra.mxu0 0.0
  %112 = vmatpush.msra.mxu0 0.0
  %113 = vmatpush.msra.mxu0 0.0
  %114 = vmatpush.msra.mxu0 0.0
  %115 = vmatpush.msra.mxu0 0.0
  %116 = vmatpush.msra.mxu0 0.0
  %117 = vmatpush.msra.mxu0 0.0
  %118 = vmatpush.msra.mxu0 0.0
  %119 = vmatpush.msra.mxu0 0.0
  %120 = vmatpush.msra.mxu0 %v109
  %121 = vmatpush.msra.mxu0 %v80
  %122 = vmatpush.msra.mxu0 %v79
  %123 = vmatpush.msra.mxu0 %v78
  %124 = vmatpush.msra.mxu0 %v77
  %125 = vmatpush.msra.mxu0 %v76
  %126 = vmatpush.msra.mxu0 %v75
  %127 = vmatmul.f32.gmra.mxu0 %v84
  %v128 = vpop.f32.mrf.mxu0
  %v129 = vadd.f32 0.0, %v128
  %130 = vmatmul.f32.gmra.mxu0 %v87
  %v131 = vpop.f32.mrf.mxu0
  %v132 = vadd.f32 0.0, %v131
  %133 = vmatmul.f32.gmra.mxu0 %v90
  %v134 = vpop.f32.mrf.mxu0
  %v135 = vadd.f32 0.0, %v134
  %136 = vmatmul.f32.gmra.mxu0 %v93
  %v137 = vpop.f32.mrf.mxu0
  %v138 = vadd.f32 0.0, %v137
  %139 = vmatmul.f32.gmra.mxu0 %v96
  %v140 = vpop.f32.mrf.mxu0
  %v141 = vadd.f32 0.0, %v140
  %142 = vmatmul.f32.gmra.mxu0 %v99
  %v143 = vpop.f32.mrf.mxu0
  %v144 = vadd.f32 0.0, %v143
  %145 = vmatmul.f32.gmra.mxu0 %v102
  %v146 = vpop.f32.mrf.mxu0
  %v147 = vadd.f32 0.0, %v146
  %148 = vmatmul.f32.gmra.mxu0 %v105
  %v149 = vpop.f32.mrf.mxu0
  %v150 = vadd.f32 0.0, %v149
  %151 = vdwg.mxu0
  %v152 = vld [vmem:[%s2] sm:$0xff]
  %v153 = vld [vmem:[%s2 + $0x8] sm:$0xff]
  %v154 = vld [vmem:[%s2 + $0x10] sm:$0xff]
  %v155 = vld [vmem:[%s2 + $0x18] sm:$0xff]
  %v156 = vld [vmem:[%s2 + $0x20] sm:$0xff]
  %v157 = vld [vmem:[%s2 + $0x28] sm:$0xff]
  %v158 = vld [vmem:[%s2 + $0x30] sm:$0xff]
  %v159 = vld [vmem:[%s2 + $0x38] sm:$0xff]
  %v160 = vld [vmem:[%s2 + $0x40] sm:$0x1]
  %v161 = vperm.slane %v160, 0
  %vm162 = vcmask 261120
  %v164 = vsel %vm162, %v129, 0
  %v167 = vsel %vm162, %v132, 0
  %v170 = vsel %vm162, %v135, 0
  %v173 = vsel %vm162, %v138, 0
  %v176 = vsel %vm162, %v141, 0
  %v179 = vsel %vm162, %v144, 0
  %v182 = vsel %vm162, %v147, 0
  %v185 = vsel %vm162, %v150, 0
  %187 = vmatpush.msra.mxu0 0.0
  %188 = vmatpush.msra.mxu0 0.0
  %189 = vmatpush.msra.mxu0 0.0
  %190 = vmatpush.msra.mxu0 0.0
  %191 = vmatpush.msra.mxu0 0.0
  %192 = vmatpush.msra.mxu0 0.0
  %193 = vmatpush.msra.mxu0 0.0
  %194 = vmatpush.msra.mxu0 0.0
  %195 = vmatpush.msra.mxu0 0.0
  %196 = vmatpush.msra.mxu0 0.0
  %197 = vmatpush.msra.mxu0 0.0
  %198 = vmatpush.msra.mxu0 0.0
  %199 = vmatpush.msra.mxu0 %v155
  %200 = vmatpush.msra.mxu0 %v154
  %201 = vmatpush.msra.mxu0 %v153
  %202 = vmatpush.msra.mxu0 %v152
  %203 = vmatmul.f32.gmra.mxu0 %v164
  %v204 = vpop.f32.mrf.mxu0
  %v205 = vadd.f32 %v161, %v204
  %206 = vmatmul.f32.gmra.mxu0 %v167
  %v207 = vpop.f32.mrf.mxu0
  %v208 = vadd.f32 %v161, %v207
  %209 = vmatmul.f32.gmra.mxu0 %v170
  %v210 = vpop.f32.mrf.mxu0
  %v211 = vadd.f32 %v161, %v210
  %212 = vmatmul.f32.gmra.mxu0 %v173
  %v213 = vpop.f32.mrf.mxu0
  %v214 = vadd.f32 %v161, %v213
  %215 = vmatmul.f32.gmra.mxu0 %v176
  %v216 = vpop.f32.mrf.mxu0
  %v217 = vadd.f32 %v161, %v216
  %218 = vmatmul.f32.gmra.mxu0 %v179
  %v219 = vpop.f32.mrf.mxu0
  %v220 = vadd.f32 %v161, %v219
  %221 = vmatmul.f32.gmra.mxu0 %v182
  %v222 = vpop.f32.mrf.mxu0
  %v223 = vadd.f32 %v161, %v222
  %224 = vmatmul.f32.gmra.mxu0 %v185
  %v225 = vpop.f32.mrf.mxu0
  %v226 = vadd.f32 %v161, %v225
  %227 = vdwg.mxu0
  %v229 = vsel %vm162, 0.0, 0
  %231 = vmatpush.msra.mxu0 0.0
  %232 = vmatpush.msra.mxu0 0.0
  %233 = vmatpush.msra.mxu0 0.0
  %234 = vmatpush.msra.mxu0 0.0
  %235 = vmatpush.msra.mxu0 0.0
  %236 = vmatpush.msra.mxu0 0.0
  %237 = vmatpush.msra.mxu0 0.0
  %238 = vmatpush.msra.mxu0 0.0
  %239 = vmatpush.msra.mxu0 0.0
  %240 = vmatpush.msra.mxu0 0.0
  %241 = vmatpush.msra.mxu0 0.0
  %242 = vmatpush.msra.mxu0 0.0
  %243 = vmatpush.msra.mxu0 %v159
  %244 = vmatpush.msra.mxu0 %v158
  %245 = vmatpush.msra.mxu0 %v157
  %246 = vmatpush.msra.mxu0 %v156
  %247 = vmatmul.f32.gmra.mxu0 %v229
  %v248 = vpop.f32.mrf.mxu0
  %v249 = vadd.f32 0.0, %v248
  %250 = vdwg.mxu0
  %v251 = vadd.f32 %v205, %v249
  %v252 = vxor.u32 %v251, 2147483648
  %v253 = vmul.f32 %v252, 1.442695
  %v254 = vpow.pop %v253
  %v255 = vadd.f32 %v254, 1.0
  %v256 = vrcp.pop %v255
  %v257 = vmul.f32 %v255, %v256
  %v258 = vsub.f32 1.0, %v257
  %v259 = vmul.f32 %v256, %v258
  %v260 = vadd.f32 %v256, %v259
  %vm261 = vweird.f32 %v255
  %vm262 = vweird.f32 %v256
  %vm263 = vmor %vm261, %vm262
  %v264 = vsel %vm263, %v256, %v260
  %v265 = vand.u32 2147483647, %v255
  %vm266 = vcmp.eq.f32.partialorder %v265, 8.507059e+37
  %v267 = vand.u32 %v255, 2147483648
  %v268 = vor.u32 1.1754944e-38, %v267
  %v269 = vsel %vm266, %v268, %v264
  %v270 = vmul.f32 1.0, %v269
  %v271 = vmul.f32 %v270, 2.0
  %v272 = vsub.f32 %v271, 1.0
  %v273 = vmul.f32 %v270, 0.0
  %275 = vrot.lane.b32.xlu0 %v272, 64
  %v276 = vpop.permute.xlu0 %275
  %v278 = vmul.f32 %v270, %v276
  %280 = vrot.lane.b32.xlu0 %v278, 32
  %v281 = vpop.permute.xlu0 %280
  %v283 = vadd.f32 %v273, %v281
  %v284 = vtanh.pop %v283
  %286 = vrot.lane.b32.xlu0 %v284, 64
  %v287 = vpop.permute.xlu0 %286
  %v289 = vmul.f32 %v270, %v287
  %vm290 = vcmp.eq.s32.totalorder %v17, 49
  %v291 = vsel %vm290, 1, 0
  %292 = vset.pattern.permute.xlu0 0
  %293 = vperm.xlu0 %292, %v291
  %v294 = vpop.permute.xlu0 %293
  %vm295 = vcmp.eq.s32.totalorder %v294, 1
  %v296 = vsel %vm295, %v289, 0.0
  %298 = vrot.lane.b32.xlu0 %v289, 32
  %v299 = vpop.permute.xlu0 %298
  %v300 = vsel %vm162, %v299, 0
  %302 = vmatpush.msra.mxu0 0.0
  %303 = vmatpush.msra.mxu0 0.0
  %304 = vmatpush.msra.mxu0 0.0
  %305 = vmatpush.msra.mxu0 0.0
  %306 = vmatpush.msra.mxu0 0.0
  %307 = vmatpush.msra.mxu0 0.0
  %308 = vmatpush.msra.mxu0 0.0
  %309 = vmatpush.msra.mxu0 0.0
  %310 = vmatpush.msra.mxu0 0.0
  %311 = vmatpush.msra.mxu0 0.0
  %312 = vmatpush.msra.mxu0 0.0
  %313 = vmatpush.msra.mxu0 0.0
  %314 = vmatpush.msra.mxu0 %v159
  %315 = vmatpush.msra.mxu0 %v158
  %316 = vmatpush.msra.mxu0 %v157
  %317 = vmatpush.msra.mxu0 %v156
  %318 = vmatmul.f32.gmra.mxu0 %v300
  %v319 = vpop.f32.mrf.mxu0
  %v320 = vadd.f32 0.0, %v319
  %321 = vdwg.mxu0
  %v322 = vadd.f32 %v208, %v320
  %v323 = vxor.u32 %v322, 2147483648
  %v324 = vmul.f32 %v323, 1.442695
  %v325 = vpow.pop %v324
  %v326 = vadd.f32 %v325, 1.0
  %v327 = vrcp.pop %v326
  %v328 = vmul.f32 %v326, %v327
  %v329 = vsub.f32 1.0, %v328
  %v330 = vmul.f32 %v327, %v329
  %v331 = vadd.f32 %v327, %v330
  %vm332 = vweird.f32 %v326
  %vm333 = vweird.f32 %v327
  %vm334 = vmor %vm332, %vm333
  %v335 = vsel %vm334, %v327, %v331
  %v336 = vand.u32 2147483647, %v326
  %vm337 = vcmp.eq.f32.partialorder %v336, 8.507059e+37
  %v338 = vand.u32 %v326, 2147483648
  %v339 = vor.u32 1.1754944e-38, %v338
  %v340 = vsel %vm337, %v339, %v335
  %v341 = vmul.f32 1.0, %v340
  %v342 = vmul.f32 %v341, 2.0
  %v343 = vsub.f32 %v342, 1.0
  %v344 = vmul.f32 %v341, %v283
  %346 = vrot.lane.b32.xlu0 %v343, 64
  %v347 = vpop.permute.xlu0 %346
  %v349 = vmul.f32 %v341, %v347
  %351 = vrot.lane.b32.xlu0 %v349, 32
  %v352 = vpop.permute.xlu0 %351
  %v354 = vadd.f32 %v344, %v352
  %v355 = vtanh.pop %v354
  %357 = vrot.lane.b32.xlu0 %v355, 64
  %v358 = vpop.permute.xlu0 %357
  %v360 = vmul.f32 %v341, %v358
  %vm361 = vcmp.eq.s32.totalorder %v18, 49
  %v362 = vsel %vm361, 1, 0
  %363 = vset.pattern.permute.xlu0 0
  %364 = vperm.xlu0 %363, %v362
  %v365 = vpop.permute.xlu0 %364
  %vm366 = vcmp.eq.s32.totalorder %v365, 1
  %v367 = vsel %vm366, %v360, %v296
  %369 = vrot.lane.b32.xlu0 %v360, 32
  %v370 = vpop.permute.xlu0 %369
  %v371 = vsel %vm162, %v370, 0
  %373 = vmatpush.msra.mxu0 0.0
  %374 = vmatpush.msra.mxu0 0.0
  %375 = vmatpush.msra.mxu0 0.0
  %376 = vmatpush.msra.mxu0 0.0
  %377 = vmatpush.msra.mxu0 0.0
  %378 = vmatpush.msra.mxu0 0.0
  %379 = vmatpush.msra.mxu0 0.0
  %380 = vmatpush.msra.mxu0 0.0
  %381 = vmatpush.msra.mxu0 0.0
  %382 = vmatpush.msra.mxu0 0.0
  %383 = vmatpush.msra.mxu0 0.0
  %384 = vmatpush.msra.mxu0 0.0
  %385 = vmatpush.msra.mxu0 %v159
  %386 = vmatpush.msra.mxu0 %v158
  %387 = vmatpush.msra.mxu0 %v157
  %388 = vmatpush.msra.mxu0 %v156
  %389 = vmatmul.f32.gmra.mxu0 %v371
  %v390 = vpop.f32.mrf.mxu0
  %v391 = vadd.f32 0.0, %v390
  %392 = vdwg.mxu0
  %v393 = vadd.f32 %v211, %v391
  %v394 = vxor.u32 %v393, 2147483648
  %v395 = vmul.f32 %v394, 1.442695
  %v396 = vpow.pop %v395
  %v397 = vadd.f32 %v396, 1.0
  %v398 = vrcp.pop %v397
  %v399 = vmul.f32 %v397, %v398
  %v400 = vsub.f32 1.0, %v399
  %v401 = vmul.f32 %v398, %v400
  %v402 = vadd.f32 %v398, %v401
  %vm403 = vweird.f32 %v397
  %vm404 = vweird.f32 %v398
  %vm405 = vmor %vm403, %vm404
  %v406 = vsel %vm405, %v398, %v402
  %v407 = vand.u32 2147483647, %v397
  %vm408 = vcmp.eq.f32.partialorder %v407, 8.507059e+37
  %v409 = vand.u32 %v397, 2147483648
  %v410 = vor.u32 1.1754944e-38, %v409
  %v411 = vsel %vm408, %v410, %v406
  %v412 = vmul.f32 1.0, %v411
  %v413 = vmul.f32 %v412, 2.0
  %v414 = vsub.f32 %v413, 1.0
  %v415 = vmul.f32 %v412, %v354
  %417 = vrot.lane.b32.xlu0 %v414, 64
  %v418 = vpop.permute.xlu0 %417
  %v420 = vmul.f32 %v412, %v418
  %422 = vrot.lane.b32.xlu0 %v420, 32
  %v423 = vpop.permute.xlu0 %422
  %v425 = vadd.f32 %v415, %v423
  %v426 = vtanh.pop %v425
  %428 = vrot.lane.b32.xlu0 %v426, 64
  %v429 = vpop.permute.xlu0 %428
  %v431 = vmul.f32 %v412, %v429
  %vm432 = vcmp.eq.s32.totalorder %v19, 49
  %v433 = vsel %vm432, 1, 0
  %434 = vset.pattern.permute.xlu0 0
  %435 = vperm.xlu0 %434, %v433
  %v436 = vpop.permute.xlu0 %435
  %vm437 = vcmp.eq.s32.totalorder %v436, 1
  %v438 = vsel %vm437, %v431, %v367
  %440 = vrot.lane.b32.xlu0 %v431, 32
  %v441 = vpop.permute.xlu0 %440
  %v442 = vsel %vm162, %v441, 0
  %444 = vmatpush.msra.mxu0 0.0
  %445 = vmatpush.msra.mxu0 0.0
  %446 = vmatpush.msra.mxu0 0.0
  %447 = vmatpush.msra.mxu0 0.0
  %448 = vmatpush.msra.mxu0 0.0
  %449 = vmatpush.msra.mxu0 0.0
  %450 = vmatpush.msra.mxu0 0.0
  %451 = vmatpush.msra.mxu0 0.0
  %452 = vmatpush.msra.mxu0 0.0
  %453 = vmatpush.msra.mxu0 0.0
  %454 = vmatpush.msra.mxu0 0.0
  %455 = vmatpush.msra.mxu0 0.0
  %456 = vmatpush.msra.mxu0 %v159
  %457 = vmatpush.msra.mxu0 %v158
  %458 = vmatpush.msra.mxu0 %v157
  %459 = vmatpush.msra.mxu0 %v156
  %460 = vmatmul.f32.gmra.mxu0 %v442
  %v461 = vpop.f32.mrf.mxu0
  %v462 = vadd.f32 0.0, %v461
  %463 = vdwg.mxu0
  %v464 = vadd.f32 %v214, %v462
  %v465 = vxor.u32 %v464, 2147483648
  %v466 = vmul.f32 %v465, 1.442695
  %v467 = vpow.pop %v466
  %v468 = vadd.f32 %v467, 1.0
  %v469 = vrcp.pop %v468
  %v470 = vmul.f32 %v468, %v469
  %v471 = vsub.f32 1.0, %v470
  %v472 = vmul.f32 %v469, %v471
  %v473 = vadd.f32 %v469, %v472
  %vm474 = vweird.f32 %v468
  %vm475 = vweird.f32 %v469
  %vm476 = vmor %vm474, %vm475
  %v477 = vsel %vm476, %v469, %v473
  %v478 = vand.u32 2147483647, %v468
  %vm479 = vcmp.eq.f32.partialorder %v478, 8.507059e+37
  %v480 = vand.u32 %v468, 2147483648
  %v481 = vor.u32 1.1754944e-38, %v480
  %v482 = vsel %vm479, %v481, %v477
  %v483 = vmul.f32 1.0, %v482
  %v484 = vmul.f32 %v483, 2.0
  %v485 = vsub.f32 %v484, 1.0
  %v486 = vmul.f32 %v483, %v425
  %488 = vrot.lane.b32.xlu0 %v485, 64
  %v489 = vpop.permute.xlu0 %488
  %v491 = vmul.f32 %v483, %v489
  %493 = vrot.lane.b32.xlu0 %v491, 32
  %v494 = vpop.permute.xlu0 %493
  %v496 = vadd.f32 %v486, %v494
  %v497 = vtanh.pop %v496
  %499 = vrot.lane.b32.xlu0 %v497, 64
  %v500 = vpop.permute.xlu0 %499
  %v502 = vmul.f32 %v483, %v500
  %vm503 = vcmp.eq.s32.totalorder %v20, 49
  %v504 = vsel %vm503, 1, 0
  %505 = vset.pattern.permute.xlu0 0
  %506 = vperm.xlu0 %505, %v504
  %v507 = vpop.permute.xlu0 %506
  %vm508 = vcmp.eq.s32.totalorder %v507, 1
  %v509 = vsel %vm508, %v502, %v438
  %511 = vrot.lane.b32.xlu0 %v502, 32
  %v512 = vpop.permute.xlu0 %511
  %v513 = vsel %vm162, %v512, 0
  %515 = vmatpush.msra.mxu0 0.0
  %516 = vmatpush.msra.mxu0 0.0
  %517 = vmatpush.msra.mxu0 0.0
  %518 = vmatpush.msra.mxu0 0.0
  %519 = vmatpush.msra.mxu0 0.0
  %520 = vmatpush.msra.mxu0 0.0
  %521 = vmatpush.msra.mxu0 0.0
  %522 = vmatpush.msra.mxu0 0.0
  %523 = vmatpush.msra.mxu0 0.0
  %524 = vmatpush.msra.mxu0 0.0
  %525 = vmatpush.msra.mxu0 0.0
  %526 = vmatpush.msra.mxu0 0.0
  %527 = vmatpush.msra.mxu0 %v159
  %528 = vmatpush.msra.mxu0 %v158
  %529 = vmatpush.msra.mxu0 %v157
  %530 = vmatpush.msra.mxu0 %v156
  %531 = vmatmul.f32.gmra.mxu0 %v513
  %v532 = vpop.f32.mrf.mxu0
  %v533 = vadd.f32 0.0, %v532
  %534 = vdwg.mxu0
  %v535 = vadd.f32 %v217, %v533
  %v536 = vxor.u32 %v535, 2147483648
  %v537 = vmul.f32 %v536, 1.442695
  %v538 = vpow.pop %v537
  %v539 = vadd.f32 %v538, 1.0
  %v540 = vrcp.pop %v539
  %v541 = vmul.f32 %v539, %v540
  %v542 = vsub.f32 1.0, %v541
  %v543 = vmul.f32 %v540, %v542
  %v544 = vadd.f32 %v540, %v543
  %vm545 = vweird.f32 %v539
  %vm546 = vweird.f32 %v540
  %vm547 = vmor %vm545, %vm546
  %v548 = vsel %vm547, %v540, %v544
  %v549 = vand.u32 2147483647, %v539
  %vm550 = vcmp.eq.f32.partialorder %v549, 8.507059e+37
  %v551 = vand.u32 %v539, 2147483648
  %v552 = vor.u32 1.1754944e-38, %v551
  %v553 = vsel %vm550, %v552, %v548
  %v554 = vmul.f32 1.0, %v553
  %v555 = vmul.f32 %v554, 2.0
  %v556 = vsub.f32 %v555, 1.0
  %v557 = vmul.f32 %v554, %v496
  %559 = vrot.lane.b32.xlu0 %v556, 64
  %v560 = vpop.permute.xlu0 %559
  %v562 = vmul.f32 %v554, %v560
  %564 = vrot.lane.b32.xlu0 %v562, 32
  %v565 = vpop.permute.xlu0 %564
  %v567 = vadd.f32 %v557, %v565
  %v568 = vtanh.pop %v567
  %570 = vrot.lane.b32.xlu0 %v568, 64
  %v571 = vpop.permute.xlu0 %570
  %v573 = vmul.f32 %v554, %v571
  %vm574 = vcmp.eq.s32.totalorder %v21, 49
  %v575 = vsel %vm574, 1, 0
  %576 = vset.pattern.permute.xlu0 0
  %577 = vperm.xlu0 %576, %v575
  %v578 = vpop.permute.xlu0 %577
  %vm579 = vcmp.eq.s32.totalorder %v578, 1
  %v580 = vsel %vm579, %v573, %v509
  %582 = vrot.lane.b32.xlu0 %v573, 32
  %v583 = vpop.permute.xlu0 %582
  %v584 = vsel %vm162, %v583, 0
  %586 = vmatpush.msra.mxu0 0.0
  %587 = vmatpush.msra.mxu0 0.0
  %588 = vmatpush.msra.mxu0 0.0
  %589 = vmatpush.msra.mxu0 0.0
  %590 = vmatpush.msra.mxu0 0.0
  %591 = vmatpush.msra.mxu0 0.0
  %592 = vmatpush.msra.mxu0 0.0
  %593 = vmatpush.msra.mxu0 0.0
  %594 = vmatpush.msra.mxu0 0.0
  %595 = vmatpush.msra.mxu0 0.0
  %596 = vmatpush.msra.mxu0 0.0
  %597 = vmatpush.msra.mxu0 0.0
  %598 = vmatpush.msra.mxu0 %v159
  %599 = vmatpush.msra.mxu0 %v158
  %600 = vmatpush.msra.mxu0 %v157
  %601 = vmatpush.msra.mxu0 %v156
  %602 = vmatmul.f32.gmra.mxu0 %v584
  %v603 = vpop.f32.mrf.mxu0
  %v604 = vadd.f32 0.0, %v603
  %605 = vdwg.mxu0
  %v606 = vadd.f32 %v220, %v604
  %v607 = vxor.u32 %v606, 2147483648
  %v608 = vmul.f32 %v607, 1.442695
  %v609 = vpow.pop %v608
  %v610 = vadd.f32 %v609, 1.0
  %v611 = vrcp.pop %v610
  %v612 = vmul.f32 %v610, %v611
  %v613 = vsub.f32 1.0, %v612
  %v614 = vmul.f32 %v611, %v613
  %v615 = vadd.f32 %v611, %v614
  %vm616 = vweird.f32 %v610
  %vm617 = vweird.f32 %v611
  %vm618 = vmor %vm616, %vm617
  %v619 = vsel %vm618, %v611, %v615
  %v620 = vand.u32 2147483647, %v610
  %vm621 = vcmp.eq.f32.partialorder %v620, 8.507059e+37
  %v622 = vand.u32 %v610, 2147483648
  %v623 = vor.u32 1.1754944e-38, %v622
  %v624 = vsel %vm621, %v623, %v619
  %v625 = vmul.f32 1.0, %v624
  %v626 = vmul.f32 %v625, 2.0
  %v627 = vsub.f32 %v626, 1.0
  %v628 = vmul.f32 %v625, %v567
  %630 = vrot.lane.b32.xlu0 %v627, 64
  %v631 = vpop.permute.xlu0 %630
  %v633 = vmul.f32 %v625, %v631
  %635 = vrot.lane.b32.xlu0 %v633, 32
  %v636 = vpop.permute.xlu0 %635
  %v638 = vadd.f32 %v628, %v636
  %v639 = vtanh.pop %v638
  %641 = vrot.lane.b32.xlu0 %v639, 64
  %v642 = vpop.permute.xlu0 %641
  %v644 = vmul.f32 %v625, %v642
  %vm645 = vcmp.eq.s32.totalorder %v22, 49
  %v646 = vsel %vm645, 1, 0
  %647 = vset.pattern.permute.xlu0 0
  %648 = vperm.xlu0 %647, %v646
  %v649 = vpop.permute.xlu0 %648
  %vm650 = vcmp.eq.s32.totalorder %v649, 1
  %v651 = vsel %vm650, %v644, %v580
  %653 = vrot.lane.b32.xlu0 %v644, 32
  %v654 = vpop.permute.xlu0 %653
  %v655 = vsel %vm162, %v654, 0
  %657 = vmatpush.msra.mxu0 0.0
  %658 = vmatpush.msra.mxu0 0.0
  %659 = vmatpush.msra.mxu0 0.0
  %660 = vmatpush.msra.mxu0 0.0
  %661 = vmatpush.msra.mxu0 0.0
  %662 = vmatpush.msra.mxu0 0.0
  %663 = vmatpush.msra.mxu0 0.0
  %664 = vmatpush.msra.mxu0 0.0
  %665 = vmatpush.msra.mxu0 0.0
  %666 = vmatpush.msra.mxu0 0.0
  %667 = vmatpush.msra.mxu0 0.0
  %668 = vmatpush.msra.mxu0 0.0
  %669 = vmatpush.msra.mxu0 %v159
  %670 = vmatpush.msra.mxu0 %v158
  %671 = vmatpush.msra.mxu0 %v157
  %672 = vmatpush.msra.mxu0 %v156
  %673 = vmatmul.f32.gmra.mxu0 %v655
  %v674 = vpop.f32.mrf.mxu0
  %v675 = vadd.f32 0.0, %v674
  %676 = vdwg.mxu0
  %v677 = vadd.f32 %v223, %v675
  %v678 = vxor.u32 %v677, 2147483648
  %v679 = vmul.f32 %v678, 1.442695
  %v680 = vpow.pop %v679
  %v681 = vadd.f32 %v680, 1.0
  %v682 = vrcp.pop %v681
  %v683 = vmul.f32 %v681, %v682
  %v684 = vsub.f32 1.0, %v683
  %v685 = vmul.f32 %v682, %v684
  %v686 = vadd.f32 %v682, %v685
  %vm687 = vweird.f32 %v681
  %vm688 = vweird.f32 %v682
  %vm689 = vmor %vm687, %vm688
  %v690 = vsel %vm689, %v682, %v686
  %v691 = vand.u32 2147483647, %v681
  %vm692 = vcmp.eq.f32.partialorder %v691, 8.507059e+37
  %v693 = vand.u32 %v681, 2147483648
  %v694 = vor.u32 1.1754944e-38, %v693
  %v695 = vsel %vm692, %v694, %v690
  %v696 = vmul.f32 1.0, %v695
  %v697 = vmul.f32 %v696, 2.0
  %v698 = vsub.f32 %v697, 1.0
  %v699 = vmul.f32 %v696, %v638
  %701 = vrot.lane.b32.xlu0 %v698, 64
  %v702 = vpop.permute.xlu0 %701
  %v704 = vmul.f32 %v696, %v702
  %706 = vrot.lane.b32.xlu0 %v704, 32
  %v707 = vpop.permute.xlu0 %706
  %v709 = vadd.f32 %v699, %v707
  %v710 = vtanh.pop %v709
  %712 = vrot.lane.b32.xlu0 %v710, 64
  %v713 = vpop.permute.xlu0 %712
  %v715 = vmul.f32 %v696, %v713
  %vm716 = vcmp.eq.s32.totalorder %v23, 49
  %v717 = vsel %vm716, 1, 0
  %718 = vset.pattern.permute.xlu0 0
  %719 = vperm.xlu0 %718, %v717
  %v720 = vpop.permute.xlu0 %719
  %vm721 = vcmp.eq.s32.totalorder %v720, 1
  %v722 = vsel %vm721, %v715, %v651
  %724 = vrot.lane.b32.xlu0 %v715, 32
  %v725 = vpop.permute.xlu0 %724
  %v726 = vsel %vm162, %v725, 0
  %728 = vmatpush.msra.mxu0 0.0
  %729 = vmatpush.msra.mxu0 0.0
  %730 = vmatpush.msra.mxu0 0.0
  %731 = vmatpush.msra.mxu0 0.0
  %732 = vmatpush.msra.mxu0 0.0
  %733 = vmatpush.msra.mxu0 0.0
  %734 = vmatpush.msra.mxu0 0.0
  %735 = vmatpush.msra.mxu0 0.0
  %736 = vmatpush.msra.mxu0 0.0
  %737 = vmatpush.msra.mxu0 0.0
  %738 = vmatpush.msra.mxu0 0.0
  %739 = vmatpush.msra.mxu0 0.0
  %740 = vmatpush.msra.mxu0 %v159
  %741 = vmatpush.msra.mxu0 %v158
  %742 = vmatpush.msra.mxu0 %v157
  %743 = vmatpush.msra.mxu0 %v156
  %744 = vmatmul.f32.gmra.mxu0 %v726
  %v745 = vpop.f32.mrf.mxu0
  %v746 = vadd.f32 0.0, %v745
  %747 = vdwg.mxu0
  %v748 = vadd.f32 %v226, %v746
  %v749 = vxor.u32 %v748, 2147483648
  %v750 = vmul.f32 %v749, 1.442695
  %v751 = vpow.pop %v750
  %v752 = vadd.f32 %v751, 1.0
  %v753 = vrcp.pop %v752
  %v754 = vmul.f32 %v752, %v753
  %v755 = vsub.f32 1.0, %v754
  %v756 = vmul.f32 %v753, %v755
  %v757 = vadd.f32 %v753, %v756
  %vm758 = vweird.f32 %v752
  %vm759 = vweird.f32 %v753
  %vm760 = vmor %vm758, %vm759
  %v761 = vsel %vm760, %v753, %v757
  %v762 = vand.u32 2147483647, %v752
  %vm763 = vcmp.eq.f32.partialorder %v762, 8.507059e+37
  %v764 = vand.u32 %v752, 2147483648
  %v765 = vor.u32 1.1754944e-38, %v764
  %v766 = vsel %vm763, %v765, %v761
  %v767 = vmul.f32 1.0, %v766
  %v768 = vmul.f32 %v767, 2.0
  %v769 = vsub.f32 %v768, 1.0
  %v770 = vmul.f32 %v767, %v709
  %772 = vrot.lane.b32.xlu0 %v769, 64
  %v773 = vpop.permute.xlu0 %772
  %v775 = vmul.f32 %v767, %v773
  %777 = vrot.lane.b32.xlu0 %v775, 32
  %v778 = vpop.permute.xlu0 %777
  %v780 = vadd.f32 %v770, %v778
  %v781 = vtanh.pop %v780
  %783 = vrot.lane.b32.xlu0 %v781, 64
  %v784 = vpop.permute.xlu0 %783
  %v786 = vmul.f32 %v767, %v784
  %vm787 = vcmp.eq.s32.totalorder %v24, 49
  %v788 = vsel %vm787, 1, 0
  %789 = vset.pattern.permute.xlu0 0
  %790 = vperm.xlu0 %789, %v788
  %v791 = vpop.permute.xlu0 %790
  %vm792 = vcmp.eq.s32.totalorder %v791, 1
  %v793 = vsel %vm792, %v786, %v722
  %v794 = vld [vmem:[%s3] sm:$0xff]
  %v795 = vld [vmem:[%s3 + $0x8] sm:$0xff]
  %v796 = vld [vmem:[%s3 + $0x10] sm:$0xff]
  %v797 = vld [vmem:[%s3 + $0x18] sm:$0xff]
  %v798 = vld [vmem:[%s3 + $0x20] sm:$0x1]
  %v800 = vrot.slane %v793, 4
  %v802 = vmul.f32 %v793, %v800
  %v803 = vperm.slane %v798, 0
  %805 = vrot.lane.b32.xlu0 %v802, 32
  %v806 = vpop.permute.xlu0 %805
  %v807 = vsel %vm162, %v806, 0
  %809 = vmatpush.msra.mxu0 0.0
  %810 = vmatpush.msra.mxu0 0.0
  %811 = vmatpush.msra.mxu0 0.0
  %812 = vmatpush.msra.mxu0 0.0
  %813 = vmatpush.msra.mxu0 0.0
  %814 = vmatpush.msra.mxu0 0.0
  %815 = vmatpush.msra.mxu0 0.0
  %816 = vmatpush.msra.mxu0 0.0
  %817 = vmatpush.msra.mxu0 0.0
  %818 = vmatpush.msra.mxu0 0.0
  %819 = vmatpush.msra.mxu0 0.0
  %820 = vmatpush.msra.mxu0 0.0
  %821 = vmatpush.msra.mxu0 %v797
  %822 = vmatpush.msra.mxu0 %v796
  %823 = vmatpush.msra.mxu0 %v795
  %824 = vmatpush.msra.mxu0 %v794
  %825 = vmatmul.f32.gmra.mxu0 %v807
  %v826 = vpop.f32.mrf.mxu0
  %v827 = vadd.f32 %v803, %v826
  %828 = vdwg.mxu0
  %vm829 = vcmask 11264
  %830 = vst.msk [vmem:[%s4] sm:$0xf] %vm829, %v827
  // Predicated region
  $region18: #{domslc_forward.1} parent=0 // pred_check
    _
  $region19: #{domslc_forward.1} parent=0 // pred_check_branch
    %832 = sbr.rel (0) target = $region21
  $region20: #{domslc_forward.1} parent=0 // pred_region
    _
  $region21: #{domslc_forward.1} parent=0 // pred_fallthru
    _
  // Predicated region
  $region22: #{domslc_forward.1} parent=0 // pred_check
    _
  $region23: #{domslc_forward.1} parent=0 // pred_check_branch
    %834 = sbr.rel (0) target = $region25
  $region24: #{domslc_forward.1} parent=0 // pred_region
    _
  $region25: #{domslc_forward.1} parent=0 // pred_fallthru
    _

</llo_original>
